<compile_context>
chip_gen: v7x
topology: tpu7x:2x2x1
jax: 0.10.0
libtpu: 0.0.40
codegen_flags: <defaults>
</compile_context>

<pallas_src>
import functools

import jax
import jax.numpy as jnp
from jax import lax
from jax.experimental import pallas as pl
from jax.experimental.pallas import tpu as pltpu


def _round_up(x, m):
    return (x + m - 1) // m * m


def conv_stats_kernel(x_ref, w_ref, b_ref, mask_ref, conv_ref, stats_ref, *,
                      KH, KW, Wp, Ltile, Win):
    """Folded-tap conv (one MXU matmul) + masked per-channel [sum, sumsq] per grid step.

    x_ref:     (1, Cin_p, Lx)      bf16  flattened zero-padded image (+ zero tail)
    w_ref:     (Cout, KH*KW*Cin_p) bf16  folded conv weights
    b_ref:     (Cout, 1)           f32   conv bias
    mask_ref:  (1, Ltile)          f32   1.0 at dense columns that are real (strided) outputs
    conv_ref:  (1, Cout, Ltile)    f32   dense (stride-1) conv output tile, channels-first
    stats_ref: (1, 1, Cout, 2)     f32   per-(image, tile) per-channel [sum, sum-of-squares]
    """
    lt = pl.program_id(1)
    base = pl.multiple_of(lt * Ltile, 128)

    # bf16 window of the flat padded image covering every tap offset of this L-tile.
    xw = x_ref[0, :, pl.ds(base, Win)]                        # (Cin_p, Win) bf16

    # Each dense-conv tap (kh, kw) is the same image shifted by kh*Wp + kw lanes.
    taps = []
    for kh in range(KH):
        for kw in range(KW):
            off = kh * Wp + kw
            taps.append(xw[:, off:off + Ltile])               # (Cin_p, Ltile) bf16
    patches = jnp.concatenate(taps, axis=0)                   # (KH*KW*Cin_p, Ltile) bf16

    # Single folded MXU matmul, f32 accumulation, lane-dense (Cout, Ltile) result.
    acc = jnp.dot(w_ref[...], patches, preferred_element_type=jnp.float32)
    acc = acc + b_ref[...]                                    # conv bias
    conv_ref[0] = acc

    # Fused one-sweep BN partial statistics, masked by the host-precomputed validity mask.
    m = mask_ref[...]                                         # (1, Ltile) f32
    am = acc * m
    s1 = jnp.sum(am, axis=1, keepdims=True)                   # (Cout, 1) sum
    s2 = jnp.sum(am * acc, axis=1, keepdims=True)             # (Cout, 1) sum of squares
    stats_ref[0, 0] = jnp.concatenate([s1, s2], axis=1)       # single (Cout, 2) store


def bn_relu_compact_kernel(conv_ref, scale_ref, shift_ref, out_ref, *,
                           Wp, Ho, Wo, stride, Mpad):
    """Folded BN affine + ReLU fused with crop/stride compaction for one image.

    conv_ref: (1, Cout, Lpad) f32 dense conv
    out_ref:  (1, Cout, Mpad) f32 compact NCHW-flattened output (lane-dense)
    """
    y = jnp.maximum(conv_ref[0] * scale_ref[...] + shift_ref[...], 0.0)   # (Cout, Lpad)
    segs = []
    for ho in range(Ho):
        start = ho * stride * Wp
        if stride == 1:
            segs.append(y[:, start:start + Wo])
        else:
            segs.append(lax.slice_in_dim(y, start, start + (Wo - 1) * stride + 1,
                                         stride=stride, axis=1))
    compact = jnp.concatenate(segs, axis=1)                   # (Cout, Ho*Wo)
    if Mpad > Ho * Wo:
        compact = jnp.pad(compact, ((0, 0), (0, Mpad - Ho * Wo)))
    out_ref[0] = compact                                      # one unmasked full-width store


def conv_module_forward(x_nchw, weight, bias, gamma, beta, *, stride, eps=1e-5):
    """ConvModule forward.  x_nchw: (N, Cin, H, W) f32 -> (N, Cout, Ho, Wo) f32 (NCHW)."""
    N, Cin, H, W = x_nchw.shape
    Cout, _, KH, KW = weight.shape
    pad_h, pad_w = KH // 2, KW // 2
    Hp, Wp = H + 2 * pad_h, W + 2 * pad_w
    Ho = (Hp - KH) // stride + 1
    Wo = (Wp - KW) // stride + 1
    Hd = Hp - KH + 1                        # dense (stride-1) output rows
    L = Hd * Wp                             # dense conv columns per image (incl. seam cols)
    Cin_p = _round_up(Cin, 8)               # sublane-aligned contraction blocks
    Ktot = KH * KW * Cin_p
    max_off = (KH - 1) * Wp + (KW - 1)

    # Lane tiling: Ltile <= 1024 keeps per-step VMEM well inside v7x's 64 MiB.
    Ltile = min(_round_up(L, 128), 1024)
    nLt = -(-L // Ltile)
    Lpad = nLt * Ltile
    Win = _round_up(Ltile + max_off, 128)   # per-tile image window (covers all taps)
    Lx = (nLt - 1) * Ltile + Win            # flat padded-image length (>= Hp*Wp)
    Mout = Ho * Wo
    Mpad = _round_up(Mout, 128)

    # ---- glue: layout prep (1x input bytes; no im2col materialized in HBM) ----
    xp = jnp.pad(x_nchw, ((0, 0), (0, Cin_p - Cin), (pad_h, pad_h), (pad_w, pad_w)))
    x_flat = xp.reshape(N, Cin_p, Hp * Wp)
    x_flat = jnp.pad(x_flat, ((0, 0), (0, 0), (0, Lx - Hp * Wp))).astype(jnp.bfloat16)
    w_p = jnp.pad(weight, ((0, 0), (0, Cin_p - Cin), (0, 0), (0, 0)))
    w2 = jnp.transpose(w_p, (0, 2, 3, 1)).reshape(Cout, Ktot).astype(jnp.bfloat16)
    b2 = bias.reshape(Cout, 1).astype(jnp.float32)

    # Host-precomputed validity mask over dense conv columns (real strided outputs only).
    l_idx = jnp.arange(Lpad, dtype=jnp.int32)
    r, c = l_idx // Wp, l_idx % Wp
    valid = ((r % stride == 0) & (r // stride < Ho)
             & (c % stride == 0) & (c // stride < Wo) & (l_idx < L))
    mask = valid.astype(jnp.float32).reshape(1, Lpad)

    # ---- pass 1: conv + per-(image, tile) BN partial stats ----
    kernel1 = functools.partial(conv_stats_kernel, KH=KH, KW=KW, Wp=Wp,
                                Ltile=Ltile, Win=Win)
    flops1 = 2 * N * Cout * Ktot * Lpad
    bytes1 = (x_flat.size * 2 + w2.size * 2 + b2.size * 4 + mask.size * 4
              + N * Cout * Lpad * 4 + N * nLt * Cout * 2 * 4)
    conv_d, stats = pl.pallas_call(
        kernel1,
        grid=(N, nLt),
        in_specs=[
            pl.BlockSpec((1, Cin_p, Lx), lambda n, t: (n, 0, 0)),   # fetched once per image
            pl.BlockSpec((Cout, Ktot), lambda n, t: (0, 0)),
            pl.BlockSpec((Cout, 1), lambda n, t: (0, 0)),
            pl.BlockSpec((1, Ltile), lambda n, t: (0, t)),
        ],
        out_specs=(
            pl.BlockSpec((1, Cout, Ltile), lambda n, t: (n, 0, t)),
            pl.BlockSpec((1, 1, Cout, 2), lambda n, t: (n, t, 0, 0)),
        ),
        out_shape=(
            jax.ShapeDtypeStruct((N, Cout, Lpad), jnp.float32),
            jax.ShapeDtypeStruct((N, nLt, Cout, 2), jnp.float32),
        ),
        compiler_params=pltpu.CompilerParams(
            dimension_semantics=("parallel", "parallel"),
            vmem_limit_bytes=32 * 1024 * 1024),
        cost_estimate=pl.CostEstimate(flops=flops1, transcendentals=0,
                                      bytes_accessed=bytes1),
    )(x_flat, w2, b2, mask)

    # ---- tiny finalize: Chan-style (count, mean, M2) combine -> folded scale/shift ----
    cnt_t = mask.reshape(nLt, Ltile).sum(axis=1).reshape(1, nLt, 1)   # valid cols per tile
    s1 = stats[..., 0]                                                # (N, nLt, Cout)
    s2 = stats[..., 1]
    count = float(N * Ho * Wo)
    mean_b = jnp.where(cnt_t > 0, s1 / jnp.maximum(cnt_t, 1.0), 0.0)  # per-block mean
    m2_b = jnp.maximum(s2 - s1 * mean_b, 0.0)                         # per-block M2
    mean = jnp.sum(s1, axis=(0, 1)) / count                           # (Cout,)
    m2 = jnp.sum(m2_b, axis=(0, 1)) + jnp.sum(cnt_t * (mean_b - mean) ** 2, axis=(0, 1))
    var = jnp.maximum(m2 / count, 0.0)                                # biased train-mode var
    scale_f = gamma.astype(jnp.float32) * lax.rsqrt(var + eps)
    shift_f = beta.astype(jnp.float32) - mean * scale_f
    scale = scale_f.reshape(Cout, 1)
    shift = shift_f.reshape(Cout, 1)

    # ---- pass 2: BN affine + ReLU fused with crop/stride compaction ----
    kernel2 = functools.partial(bn_relu_compact_kernel, Wp=Wp, Ho=Ho, Wo=Wo,
                                stride=stride, Mpad=Mpad)
    out_c = pl.pallas_call(
        kernel2,
        grid=(N,),
        in_specs=[
            pl.BlockSpec((1, Cout, Lpad), lambda n: (n, 0, 0)),
            pl.BlockSpec((Cout, 1), lambda n: (0, 0)),
            pl.BlockSpec((Cout, 1), lambda n: (0, 0)),
        ],
        out_specs=pl.BlockSpec((1, Cout, Mpad), lambda n: (n, 0, 0)),
        out_shape=jax.ShapeDtypeStruct((N, Cout, Mpad), jnp.float32),
        compiler_params=pltpu.CompilerParams(
            dimension_semantics=("parallel",),
            vmem_limit_bytes=32 * 1024 * 1024),
        cost_estimate=pl.CostEstimate(flops=3 * N * Cout * Lpad, transcendentals=0,
                                      bytes_accessed=N * Cout * (Lpad + Mpad) * 4),
    )(conv_d, scale, shift)

    # ---- glue: compact block is already NCHW-flattened; drop lane padding & reshape ----
    return out_c[:, :, :Mout].reshape(N, Cout, Ho, Wo)


def _reference(x, weight, bias, gamma, beta, *, stride, eps=1e-5):
    """Pure-JAX reference mirroring PyTorch ConvModule (train-mode BN) semantics."""
    Cout = weight.shape[0]
    pad = weight.shape[2] // 2
    conv = lax.conv_general_dilated(
        x, weight, window_strides=(stride, stride),
        padding=[(pad, pad), (pad, pad)],
        dimension_numbers=("NCHW", "OIHW", "NCHW"))
    conv = conv + bias.reshape(1, Cout, 1, 1)
    mean = conv.mean(axis=(0, 2, 3), keepdims=True)
    var = ((conv - mean) ** 2).mean(axis=(0, 2, 3), keepdims=True)
    y = (conv - mean) * lax.rsqrt(var + eps) * gamma.reshape(1, Cout, 1, 1) \
        + beta.reshape(1, Cout, 1, 1)
    return jnp.maximum(y, 0.0)


if __name__ == "__main__":
    # ConvModule(in_channels=4, out_channels=8, kernel_size=3, stride=1)
    N, Cin, H, W = 2, 4, 16, 16
    Cout, K, stride = 8, 3, 1

    key = jax.random.PRNGKey(0)
    kx, kw, kb = jax.random.split(key, 3)
    x = jax.random.normal(kx, (N, Cin, H, W), jnp.float32)
    weight = jax.random.normal(kw, (Cout, Cin, K, K), jnp.float32) * 0.1   # conv.weight
    bias = jax.random.normal(kb, (Cout,), jnp.float32) * 0.1               # conv.bias
    gamma = jnp.ones((Cout,), jnp.float32)                                  # bn.weight init
    beta = jnp.zeros((Cout,), jnp.float32)                                  # bn.bias init

    out = conv_module_forward(x, weight, bias, gamma, beta, stride=stride)
    out = jax.block_until_ready(out)
    assert out.shape == (N, Cout, H, W) and out.dtype == jnp.float32

    # Tight check: identical math up to the intentional bf16 rounding of x / conv.weight
    # (MXU operands); everything else (accumulation, BN stats, affine, ReLU) is f32.
    x_q = x.astype(jnp.bfloat16).astype(jnp.float32)
    w_q = weight.astype(jnp.bfloat16).astype(jnp.float32)
    ref_q = _reference(x_q, w_q, bias, gamma, beta, stride=stride)
    assert jnp.allclose(out, ref_q, atol=2e-3, rtol=2e-3), "mismatch vs bf16-rounded ref"

    # Sanity check vs the exact f32 module (difference == bf16 input/weight rounding).
    ref = _reference(x, weight, bias, gamma, beta, stride=stride)
    assert jnp.allclose(out, ref, atol=5e-2, rtol=5e-2), "mismatch vs f32 reference"

    print("KERNEL_OK")
</pallas_src>

<mosaic_0001>
module attributes {stable_mosaic.version = 11 : i64} {
  func.func @conv_stats_kernel(%arg0: i32, %arg1: i32, %arg2: memref<1x8x512xbf16, #tpu.memory_space<vmem>>, %arg3: memref<8x72xbf16, #tpu.memory_space<vmem>>, %arg4: memref<8x1xf32, #tpu.memory_space<vmem>>, %arg5: memref<1x384xf32, #tpu.memory_space<vmem>>, %arg6: memref<1x8x384xf32, #tpu.memory_space<vmem>>, %arg7: memref<1x1x8x2xf32, #tpu.memory_space<vmem>>) attributes {dimension_semantics = [#tpu.dimension_semantics<parallel>, #tpu.dimension_semantics<parallel>], iteration_bounds = array<i64: 2, 1>, scalar_prefetch = 0 : i64, scratch_operands = 0 : i64, tpu.core_type = #tpu.core_type<tc>, window_params = [{transform_indices = @transform_0, window_bounds = array<i64: 1, 8, 512>}, {pipeline_mode = #tpu.pipeline_mode<synchronous>, transform_indices = @transform_1, window_bounds = array<i64: 8, 72>}, {pipeline_mode = #tpu.pipeline_mode<synchronous>, transform_indices = @transform_2, window_bounds = array<i64: 8, 1>}, {transform_indices = @transform_3, window_bounds = array<i64: 1, 384>}, {transform_indices = @transform_4, window_bounds = array<i64: 1, 8, 384>}, {transform_indices = @transform_5, window_bounds = array<i64: 1, 1, 8, 2>}]} {
    %c384_i32 = arith.constant 384 : i32
    %0 = arith.muli %arg1, %c384_i32 : i32
    %1 = tpu.assume_multiple %0, 128 : i32
    %c0 = arith.constant 0 : index
    %c0_0 = arith.constant 0 : index
    %2 = arith.index_cast %1 : i32 to index
    %3 = vector.load %arg2[%c0, %c0_0, %2] : memref<1x8x512xbf16, #tpu.memory_space<vmem>>, vector<1x8x512xbf16>
    %4 = vector.shape_cast %3 : vector<1x8x512xbf16> to vector<8x512xbf16>
    %5 = vector.extract_strided_slice %4 {offsets = [0, 0], sizes = [8, 384], strides = [1, 1]} : vector<8x512xbf16> to vector<8x384xbf16>
    %6 = vector.extract_strided_slice %4 {offsets = [0, 1], sizes = [8, 384], strides = [1, 1]} : vector<8x512xbf16> to vector<8x384xbf16>
    %7 = vector.extract_strided_slice %4 {offsets = [0, 2], sizes = [8, 384], strides = [1, 1]} : vector<8x512xbf16> to vector<8x384xbf16>
    %8 = vector.extract_strided_slice %4 {offsets = [0, 18], sizes = [8, 384], strides = [1, 1]} : vector<8x512xbf16> to vector<8x384xbf16>
    %9 = vector.extract_strided_slice %4 {offsets = [0, 19], sizes = [8, 384], strides = [1, 1]} : vector<8x512xbf16> to vector<8x384xbf16>
    %10 = vector.extract_strided_slice %4 {offsets = [0, 20], sizes = [8, 384], strides = [1, 1]} : vector<8x512xbf16> to vector<8x384xbf16>
    %11 = vector.extract_strided_slice %4 {offsets = [0, 36], sizes = [8, 384], strides = [1, 1]} : vector<8x512xbf16> to vector<8x384xbf16>
    %12 = vector.extract_strided_slice %4 {offsets = [0, 37], sizes = [8, 384], strides = [1, 1]} : vector<8x512xbf16> to vector<8x384xbf16>
    %13 = vector.extract_strided_slice %4 {offsets = [0, 38], sizes = [8, 384], strides = [1, 1]} : vector<8x512xbf16> to vector<8x384xbf16>
    %14 = tpu.concatenate %5, %6, %7, %8, %9, %10, %11, %12, %13 in 0 : vector<8x384xbf16>, vector<8x384xbf16>, vector<8x384xbf16>, vector<8x384xbf16>, vector<8x384xbf16>, vector<8x384xbf16>, vector<8x384xbf16>, vector<8x384xbf16>, vector<8x384xbf16> -> vector<72x384xbf16>
    %c0_1 = arith.constant 0 : index
    %c0_2 = arith.constant 0 : index
    %15 = vector.load %arg3[%c0_1, %c0_2] : memref<8x72xbf16, #tpu.memory_space<vmem>>, vector<8x72xbf16>
    %cst = arith.constant dense<0.000000e+00> : vector<8x384xf32>
    %16 = tpu.matmul %15, %14, %cst {dimension_numbers = #tpu.dot_dimension_numbers<[1], [0], [0], [1], [0, 0, 1, 1], [], []>} : vector<8x72xbf16>, vector<72x384xbf16>, vector<8x384xf32> -> vector<8x384xf32>
    %c0_3 = arith.constant 0 : index
    %c0_4 = arith.constant 0 : index
    %17 = vector.load %arg4[%c0_3, %c0_4] : memref<8x1xf32, #tpu.memory_space<vmem>>, vector<8x1xf32>
    %18 = vector.broadcast %17 : vector<8x1xf32> to vector<8x384xf32>
    %19 = arith.addf %16, %18 : vector<8x384xf32>
    %c0_5 = arith.constant 0 : index
    %c0_6 = arith.constant 0 : index
    %c0_7 = arith.constant 0 : index
    %20 = vector.load %arg6[%c0_5, %c0_6, %c0_7] : memref<1x8x384xf32, #tpu.memory_space<vmem>>, vector<1x8x384xf32>
    %21 = vector.shape_cast %20 : vector<1x8x384xf32> to vector<8x384xf32>
    %22 = vector.shape_cast %19 : vector<8x384xf32> to vector<1x8x384xf32>
    tpu.vector_store %arg6[%c0_5, %c0_6, %c0_7], %22 {strides = array<i32>} : memref<1x8x384xf32, #tpu.memory_space<vmem>>, vector<1x8x384xf32>,
    %c0_8 = arith.constant 0 : index
    %c0_9 = arith.constant 0 : index
    %23 = vector.load %arg5[%c0_8, %c0_9] : memref<1x384xf32, #tpu.memory_space<vmem>>, vector<1x384xf32>
    %24 = vector.broadcast %23 : vector<1x384xf32> to vector<8x384xf32>
    %25 = arith.mulf %19, %24 : vector<8x384xf32>
    %cst_10 = arith.constant dense<0.000000e+00> : vector<8xf32>
    %26 = vector.multi_reduction <add>, %25, %cst_10 [1] : vector<8x384xf32> to vector<8xf32>
    %27 = vector.shape_cast %26 : vector<8xf32> to vector<8x1xf32>
    %28 = arith.mulf %25, %19 : vector<8x384xf32>
    %cst_11 = arith.constant dense<0.000000e+00> : vector<8xf32>
    %29 = vector.multi_reduction <add>, %28, %cst_11 [1] : vector<8x384xf32> to vector<8xf32>
    %30 = vector.shape_cast %29 : vector<8xf32> to vector<8x1xf32>
    %31 = tpu.concatenate %27, %30 in 1 : vector<8x1xf32>, vector<8x1xf32> -> vector<8x2xf32>
    %c0_12 = arith.constant 0 : index
    %c0_13 = arith.constant 0 : index
    %c0_14 = arith.constant 0 : index
    %c0_15 = arith.constant 0 : index
    %32 = vector.load %arg7[%c0_12, %c0_13, %c0_14, %c0_15] : memref<1x1x8x2xf32, #tpu.memory_space<vmem>>, vector<1x1x8x2xf32>
    %33 = vector.shape_cast %32 : vector<1x1x8x2xf32> to vector<8x2xf32>
    %34 = vector.shape_cast %31 : vector<8x2xf32> to vector<1x1x8x2xf32>
    tpu.vector_store %arg7[%c0_12, %c0_13, %c0_14, %c0_15], %34 {strides = array<i32>} : memref<1x1x8x2xf32, #tpu.memory_space<vmem>>, vector<1x1x8x2xf32>,
    return
  }
  func.func @transform_0(%arg0: i32, %arg1: i32) -> (i32, i32, i32) {
    %c0_i32 = arith.constant 0 : i32
    %c0_i32_0 = arith.constant 0 : i32
    %c0_i32_1 = arith.constant 0 : i32
    return %arg0, %c0_i32, %c0_i32_0 : i32, i32, i32
  }
  func.func @transform_1(%arg0: i32, %arg1: i32) -> (i32, i32) {
    %c0_i32 = arith.constant 0 : i32
    %c0_i32_0 = arith.constant 0 : i32
    %c0_i32_1 = arith.constant 0 : i32
    return %c0_i32, %c0_i32_0 : i32, i32
  }
  func.func @transform_2(%arg0: i32, %arg1: i32) -> (i32, i32) {
    %c0_i32 = arith.constant 0 : i32
    %c0_i32_0 = arith.constant 0 : i32
    %c0_i32_1 = arith.constant 0 : i32
    return %c0_i32, %c0_i32_0 : i32, i32
  }
  func.func @transform_3(%arg0: i32, %arg1: i32) -> (i32, i32) {
    %c0_i32 = arith.constant 0 : i32
    %c0_i32_0 = arith.constant 0 : i32
    return %c0_i32, %arg1 : i32, i32
  }
  func.func @transform_4(%arg0: i32, %arg1: i32) -> (i32, i32, i32) {
    %c0_i32 = arith.constant 0 : i32
    %c0_i32_0 = arith.constant 0 : i32
    return %arg0, %c0_i32, %arg1 : i32, i32, i32
  }
  func.func @transform_5(%arg0: i32, %arg1: i32) -> (i32, i32, i32, i32) {
    %c0_i32 = arith.constant 0 : i32
    %c0_i32_0 = arith.constant 0 : i32
    %c0_i32_1 = arith.constant 0 : i32
    return %arg0, %arg1, %c0_i32, %c0_i32_0 : i32, i32, i32, i32
  }
}

</mosaic_0001>

<llo_original>
// kernel: tpu_custom_call.1
$region0: #{tpu_custom_call.1}
  #allocation0 [shape = 'u32[]', space=smem, size = 0x4, offset = 0x4, fixed_abs, tag = 'smem constant byte address 0x4 - core index']
  #allocation1 [shape = 'u32[144,128]{1,0:T(1,128)}', space=vmem, size = 0x12000, scoped, tag = 'internal scratch']
  %s0 = inlined_call_operand.hbm [shape: bf16[2,8,512], index: 0, kind: input, shape index: {}]
  %s1 = inlined_call_operand.vmem [shape: bf16[8,72], index: 1, kind: input, shape index: {}]
  %s2 = inlined_call_operand.vmem [shape: f32[8,1], index: 2, kind: input, shape index: {}]
  %s3 = inlined_call_operand.vmem [shape: f32[1,384], index: 3, kind: input, shape index: {}]
  %s4 = inlined_call_operand.hbm [shape: f32[2,8,384], index: 4, kind: output, shape index: {0}]
  %s5 = inlined_call_operand.vmem [shape: f32[2,1,8,2], index: 5, kind: output, shape index: {1}]
  %6 = xla_tuple %s4, %s5
  %s7 = sld [smem:[#allocation0]]
  $region61: #{tpu_custom_call.1} parent=0
    _
  %s9 = ssub.s32 1, %s7
  %s10 = scalar_select 0, %s9, %s7
  $region1: #{tpu_custom_call.1} parent=0
    #allocation2 [shape = 'u8[16384]{0}', space=vmem, size = 0x4000, scoped, tag = 'input window, operand 0']
    #allocation3 [shape = 's32[2]{0}', space=sflag, size = 0x8, scoped, tag = 'scoped memory for tpu_custom_call.1']
    #allocation4 [shape = 's32[2]{0}', space=sflag, size = 0x8, scoped, tag = 'scoped memory for tpu_custom_call.1']
    #allocation5 [shape = 'u8[24576]{0}', space=vmem, size = 0x6000, scoped, tag = 'output window, operand 0']
    %11 = vsyncpa [#allocation3], 0
    %s12 = scalar_lea.sflag [#allocation3], 1
    %13 = vsyncpa %s12, 0
    %14 = vsyncpa [#allocation4], 0
    %s15 = scalar_lea.sflag [#allocation4], 1
    %16 = vsyncpa %s15, 0
    loop: start=0, step=1, limit=4
    $region2: #{tpu_custom_call.1} parent=1 // loop_pre_header
      _
    $region3: #{tpu_custom_call.1} parent=1 // loop_header
      %s18 = sphi 0, %s22
      %p19 = scmp.ge.s32.totalorder %s18, 4
      %s25 = sphi 0, %s37
      %s26 = sphi 0, %s33
      %s27 = sphi 0, %s25
      %s28 = sphi 0, %s26
      %s29 = sphi 0, %s27
      %s30 = sphi 0, %s28
      %s40 = sphi 0, %s42
      %s43 = sphi 0, %s40
      %s44 = sphi 0, %s43
      %s60 = sphi 0, %s44
      %s64 = sphi 0, %s64
      %s66 = sphi 0, %s64
      %s67 = sphi 0, %s66
      %s81 = sphi 0, %s67
      %s85 = sphi 0, %s85
      %s87 = sphi 0, %s85
      %s88 = sphi 0, %s87
      %s102 = sphi 0, %s88
      %s108 = sphi 0, %s110
      %s111 = sphi 0, %s108
      %s112 = sphi 0, %s111
      %s128 = sphi 0, %s112
      %s136 = sphi 0, %s138
      %s139 = sphi 0, %s136
      %s140 = sphi 0, %s139
      %s156 = sphi 0, %s140
      %s164 = sphi 0, %s166
      %s167 = sphi 0, %s164
      %s168 = sphi 0, %s167
      %s184 = sphi 0, %s168
    $region4: #{tpu_custom_call.1} parent=1 // loop_header_branch
      %21 = sbr.rel (%p19) target = $region8
    $region5: #{tpu_custom_call.1} parent=1 // loop_body
      %s23 = ssub.s32 %s18, 1
      %s24 = ssub.s32 %s18, 2
      %s31 = sadd.s32 1, %s26
      %p32 = scmp.ge.s32.totalorder %s31, 1
      %s33 = scalar_select %p32, 0, %s31
      %s34 = sadd.s32 1, %s25
      %s35 = scalar_select %p32, %s34, %s25
      %p36 = scmp.ge.s32.totalorder %s35, 2
      %s37 = scalar_select %p36, 0, %s35
      %s38 = ssub.s32 %s25, %s37
      %p39 = scmp.eq.s32.totalorder %s38, 0
      %s41 = sadd.s32 %s40, 1
      %s42 = scalar_select %p39, %s40, %s41
      %p45 = pneg %p39
      %p46 = scmp.eq.s32.totalorder %s18, 1
      %p47 = por %p45, %p46
      %p48 = scmp.ne.s32.totalorder %s40, %s43
      %p49 = scmp.eq.s32.totalorder %s18, 0
      %p50 = por %p48, %p49
      %p51 = scmp.ne.s32.totalorder %s40, %s43
      %p52 = scmp.eq.s32.totalorder %s23, 1
      %p53 = por %p51, %p52
      %p54 = scmp.ne.s32.totalorder %s43, %s44
      %p55 = scmp.eq.s32.totalorder %s23, 0
      %p56 = por %p54, %p55
      %p57 = scmp.ne.s32.totalorder %s43, %s44
      %p58 = scmp.eq.s32.totalorder %s24, 1
      %p59 = por %p57, %p58
      %p61 = scmp.ne.s32.totalorder %s44, %s60
      %p62 = scmp.eq.s32.totalorder %s24, 0
      %p63 = por %p61, %p62
      %s65 = sadd.s32 %s64, 1
      %p68 = scmp.eq.s32.totalorder %s18, 1
      %p69 = scmp.ne.s32.totalorder %s64, %s66
      %p70 = scmp.eq.s32.totalorder %s18, 0
      %p71 = por %p69, %p70
      %p72 = scmp.ne.s32.totalorder %s64, %s66
      %p73 = scmp.eq.s32.totalorder %s23, 1
      %p74 = por %p72, %p73
      %p75 = scmp.ne.s32.totalorder %s66, %s67
      %p76 = scmp.eq.s32.totalorder %s23, 0
      %p77 = por %p75, %p76
      %p78 = scmp.ne.s32.totalorder %s66, %s67
      %p79 = scmp.eq.s32.totalorder %s24, 1
      %p80 = por %p78, %p79
      %p82 = scmp.ne.s32.totalorder %s67, %s81
      %p83 = scmp.eq.s32.totalorder %s24, 0
      %p84 = por %p82, %p83
      %s86 = sadd.s32 %s85, 1
      %p89 = scmp.eq.s32.totalorder %s18, 1
      %p90 = scmp.ne.s32.totalorder %s85, %s87
      %p91 = scmp.eq.s32.totalorder %s18, 0
      %p92 = por %p90, %p91
      %p93 = scmp.ne.s32.totalorder %s85, %s87
      %p94 = scmp.eq.s32.totalorder %s23, 1
      %p95 = por %p93, %p94
      %p96 = scmp.ne.s32.totalorder %s87, %s88
      %p97 = scmp.eq.s32.totalorder %s23, 0
      %p98 = por %p96, %p97
      %p99 = scmp.ne.s32.totalorder %s87, %s88
      %p100 = scmp.eq.s32.totalorder %s24, 1
      %p101 = por %p99, %p100
      %p103 = scmp.ne.s32.totalorder %s88, %s102
      %p104 = scmp.eq.s32.totalorder %s24, 0
      %p105 = por %p103, %p104
      %s106 = ssub.s32 %s26, %s33
      %p107 = scmp.eq.s32.totalorder %s106, 0
      %s109 = sadd.s32 %s108, 1
      %s110 = scalar_select %p107, %s108, %s109
      %p113 = pneg %p107
      %p114 = scmp.eq.s32.totalorder %s18, 1
      %p115 = por %p113, %p114
      %p116 = scmp.ne.s32.totalorder %s108, %s111
      %p117 = scmp.eq.s32.totalorder %s18, 0
      %p118 = por %p116, %p117
      %p119 = scmp.ne.s32.totalorder %s108, %s111
      %p120 = scmp.eq.s32.totalorder %s23, 1
      %p121 = por %p119, %p120
      %p122 = scmp.ne.s32.totalorder %s111, %s112
      %p123 = scmp.eq.s32.totalorder %s23, 0
      %p124 = por %p122, %p123
      %p125 = scmp.ne.s32.totalorder %s111, %s112
      %p126 = scmp.eq.s32.totalorder %s24, 1
      %p127 = por %p125, %p126
      %p129 = scmp.ne.s32.totalorder %s112, %s128
      %p130 = scmp.eq.s32.totalorder %s24, 0
      %p131 = por %p129, %p130
      %s132 = ssub.s32 %s25, %s37
      %s133 = ssub.s32 %s26, %s33
      %s134 = sor.u32 %s132, %s133
      %p135 = scmp.eq.s32.totalorder %s134, 0
      %s137 = sadd.s32 %s136, 1
      %s138 = scalar_select %p135, %s136, %s137
      %p141 = pneg %p135
      %p142 = scmp.eq.s32.totalorder %s18, 1
      %p143 = por %p141, %p142
      %p144 = scmp.ne.s32.totalorder %s136, %s139
      %p145 = scmp.eq.s32.totalorder %s18, 0
      %p146 = por %p144, %p145
      %p147 = scmp.ne.s32.totalorder %s136, %s139
      %p148 = scmp.eq.s32.totalorder %s23, 1
      %p149 = por %p147, %p148
      %p150 = scmp.ne.s32.totalorder %s139, %s140
      %p151 = scmp.eq.s32.totalorder %s23, 0
      %p152 = por %p150, %p151
      %p153 = scmp.ne.s32.totalorder %s139, %s140
      %p154 = scmp.eq.s32.totalorder %s24, 1
      %p155 = por %p153, %p154
      %p157 = scmp.ne.s32.totalorder %s140, %s156
      %p158 = scmp.eq.s32.totalorder %s24, 0
      %p159 = por %p157, %p158
      %s160 = ssub.s32 %s25, %s37
      %s161 = ssub.s32 %s26, %s33
      %s162 = sor.u32 %s160, %s161
      %p163 = scmp.eq.s32.totalorder %s162, 0
      %s165 = sadd.s32 %s164, 1
      %s166 = scalar_select %p163, %s164, %s165
      %p169 = pneg %p163
      %p170 = scmp.eq.s32.totalorder %s18, 1
      %p171 = por %p169, %p170
      %p172 = scmp.ne.s32.totalorder %s164, %s167
      %p173 = scmp.eq.s32.totalorder %s18, 0
      %p174 = por %p172, %p173
      %p175 = scmp.ne.s32.totalorder %s164, %s167
      %p176 = scmp.eq.s32.totalorder %s23, 1
      %p177 = por %p175, %p176
      %p178 = scmp.ne.s32.totalorder %s167, %s168
      %p179 = scmp.eq.s32.totalorder %s23, 0
      %p180 = por %p178, %p179
      %p181 = scmp.ne.s32.totalorder %s167, %s168
      %p182 = scmp.eq.s32.totalorder %s24, 1
      %p183 = por %p181, %p182
      %p185 = scmp.ne.s32.totalorder %s168, %s184
      %p186 = scmp.eq.s32.totalorder %s24, 0
      %p187 = por %p185, %p186
      %p188 = scmp.le.s32.totalorder 1, %s18
      %p189 = scmp.lt.s32.totalorder %s18, 3
      %p190 = pnand %p188, %p189
      %p191 = pneg %p190
      // Predicated region
      $region9: #{tpu_custom_call.1} parent=5 // pred_check
        _
      $region10: #{tpu_custom_call.1} parent=5 // pred_check_branch
        %193 = sbr.rel (%p190) target = $region12
      $region11: #{tpu_custom_call.1} parent=5 // pred_region
        %s194 = ssub.s32 %s18, 1
        // Predicated region
        $region13: #{tpu_custom_call.1} parent=11 // pred_check
          %p195 = pneg %p77
        $region14: #{tpu_custom_call.1} parent=11 // pred_check_branch
          %197 = sbr.rel (%p195) target = $region16
        $region15: #{tpu_custom_call.1} parent=11 // pred_region
          _
        $region16: #{tpu_custom_call.1} parent=11 // pred_fallthru
          _
        // Predicated region
        $region17: #{tpu_custom_call.1} parent=11 // pred_check
          %p198 = pneg %p98
        $region18: #{tpu_custom_call.1} parent=11 // pred_check_branch
          %200 = sbr.rel (%p198) target = $region20
        $region19: #{tpu_custom_call.1} parent=11 // pred_region
          _
        $region20: #{tpu_custom_call.1} parent=11 // pred_fallthru
          _
        // Predicated region
        $region21: #{tpu_custom_call.1} parent=11 // pred_check
          %p201 = pneg %p124
        $region22: #{tpu_custom_call.1} parent=11 // pred_check_branch
          %203 = sbr.rel (%p201) target = $region24
        $region23: #{tpu_custom_call.1} parent=11 // pred_region
          %s204 = smul.u32 3, %s28
          %p205 = scmp.lt.s32.totalorder %s204, 2
          %s206 = scalar_select %p205, %s204, 2
          %s207 = scalar_lea.vmem %s3, %s206
          %s208 = smul.u32 3, %s28
        $region24: #{tpu_custom_call.1} parent=11 // pred_fallthru
          _
      $region12: #{tpu_custom_call.1} parent=5 // pred_fallthru
        _
      %p209 = scmp.lt.s32.totalorder %s18, 2
      // Predicated region
      $region25: #{tpu_custom_call.1} parent=5 // pred_check
        %p210 = pneg %p209
      $region26: #{tpu_custom_call.1} parent=5 // pred_check_branch
        %212 = sbr.rel (%p210) target = $region28
      $region27: #{tpu_custom_call.1} parent=5 // pred_region
        // Predicated region
        $region29: #{tpu_custom_call.1} parent=27 // pred_check
          %p213 = pneg %p50
        $region30: #{tpu_custom_call.1} parent=27 // pred_check_branch
          %215 = sbr.rel (%p213) target = $region32
        $region31: #{tpu_custom_call.1} parent=27 // pred_region
          %s216 = sand.u32 %s40, 1
          %s217 = scalar_lea.sflag [#allocation3], %s216
          %s218 = sand.u32 %s40, 1
          %s219 = smul.addr %s218, 16
          %s220 = scalar_lea.vmem [#allocation2], %s219
          %s222 = ssub.s32 256, 256
          %223 = vsyncadd %s217, %s222
          %s224 = smul.addr %s25, 4
          %s225 = smul.addr %s224, 64
          %s226 = scalar_lea.hbm %s0, %s225
          %s228 = sshll.u32 %s220, 4
          %s229 = int_to_ptr.vmem [resolvable:$true] %s228
          %231 = dma.hbm_to_vmem [thread:$0]  %s226, 256, %s229, %s217
        $region32: #{tpu_custom_call.1} parent=27 // pred_fallthru
          _
      $region28: #{tpu_custom_call.1} parent=5 // pred_fallthru
        _
      %p232 = scmp.le.s32.totalorder 1, %s18
      %p233 = scmp.lt.s32.totalorder %s18, 3
      %p234 = pnand %p232, %p233
      %p235 = pneg %p234
      // Predicated region
      $region33: #{tpu_custom_call.1} parent=5 // pred_check
        _
      $region34: #{tpu_custom_call.1} parent=5 // pred_check_branch
        %237 = sbr.rel (%p234) target = $region36
      $region35: #{tpu_custom_call.1} parent=5 // pred_region
        %s238 = ssub.s32 %s18, 1
        %s239 = sand.u32 %s43, 1
        %s240 = scalar_lea.sflag [#allocation3], %s239
        %s241 = sand.u32 %s43, 1
        %s242 = smul.addr %s241, 16
        %s243 = scalar_lea.vmem [#allocation2], %s242
        // Predicated region
        $region37: #{tpu_custom_call.1} parent=35 // pred_check
          %p244 = pneg %p56
        $region38: #{tpu_custom_call.1} parent=35 // pred_check_branch
          %246 = sbr.rel (%p244) target = $region40
        $region39: #{tpu_custom_call.1} parent=35 // pred_region
          %247 = dma.done %s240, 256
        $region40: #{tpu_custom_call.1} parent=35 // pred_fallthru
          _
        %s248 = sand.u32 %s43, 1
        %s249 = scalar_lea.sflag [#allocation3], %s248
        %s250 = sand.u32 %s43, 1
        %s251 = smul.addr %s250, 16
        %s252 = scalar_lea.vmem [#allocation2], %s251
        %p253 = pneg %p56
        %p254 = pneg %p53
        %p255 = pneg %p77
        %p256 = pneg %p74
        %p257 = pneg %p98
        %p258 = pneg %p95
        %s259 = smul.u32 3, %s28
        %p260 = scmp.lt.s32.totalorder %s259, 2
        %s261 = scalar_select %p260, %s259, 2
        %s262 = scalar_lea.vmem %s3, %s261
        %p263 = pneg %p124
        %p264 = pneg %p121
        %p265 = pneg %p152
        %p266 = pneg %p149
        %s267 = sand.u32 %s139, 1
        %s268 = scalar_lea.sflag [#allocation4], %s267
        %s269 = sand.u32 %s139, 1
        %s270 = smul.addr %s269, 24
        %s271 = scalar_lea.vmem [#allocation5], %s270
        %p272 = pneg %p180
        %p273 = pneg %p177
        %p274 = scmp.lt.s32.totalorder %s27, 1
        %s275 = scalar_select %p274, %s27, 1
        %p276 = scmp.lt.s32.totalorder %s28, 0
        %s277 = scalar_select %p276, %s28, 0
        %s278 = sadd.s32 %s277, %s275
        %s279 = smul.addr %s278, 8
        %s280 = scalar_lea.vmem %s5, %s279
        %s281 = smul.u32 3, %s28
        %p282 = scmp.lt.s32.totalorder %s281, 2
        %s283 = scalar_select %p282, %s281, 2
        %s284 = scalar_lea.vmem %s3, %s283
        %s285 = smul.u32 3, %s28
        %s286 = smul.u32 3, %s28
        %p287 = scmp.lt.s32.totalorder %s27, 1
        %s288 = scalar_select %p287, %s27, 1
        %p289 = scmp.lt.s32.totalorder %s28, 0
        %s290 = scalar_select %p289, %s28, 0
        %s291 = sadd.s32 %s290, %s288
        %s292 = smul.addr %s291, 8
        %s293 = scalar_lea.vmem %s5, %s292
        %s295 = smul.u32 %s28, 384
        %s296 = sshra.s32 %s295, 7
        %s297 = sand.u32 %s295, 127
        %s298 = smul.addr %s296, 4
        %s299 = scalar_lea.vmem %s243, %s298 [#allocation2]
        %v300 = vld [vmem:[%s299] sm:$0xff]
        %v301 = vld [vmem:[%s299 + $0x8] sm:$0xff]
        %v304 = vunpack.c.l.b16 %v300
        %v305 = vunpack.c.h.b16 %v300
        %v306 = vunpack.c.l.b16 %v301
        %v307 = vpack.c.b16 %v304, %v304
        %v308 = vpack.c.b16 %v305, %v305
        %v309 = vpack.c.b16 %v306, %v306
        %v310 = vunpack.c.h.b16 %v301
        %v311 = vpack.c.b16 %v310, %v310
        %312 = vrot.lane.b32.xlu0 %v307, 127
        %v313 = vpop.permute.xlu0 %312
        %314 = vrot.lane.b32.xlu0 %v308, 127
        %v315 = vpop.permute.xlu0 %314
        %316 = vrot.lane.b32.xlu0 %v309, 127
        %v317 = vpop.permute.xlu0 %316
        %318 = vrot.lane.b32.xlu0 %v311, 127
        %v319 = vpop.permute.xlu0 %318
        %vm320 = vcmask 1039360
        %v321 = vsel %vm320, %v313, %v315
        %v322 = vsel %vm320, %v315, %v317
        %v323 = vsel %vm320, %v317, %v319
        %324 = vrot.lane.b32.xlu0 %v307, 126
        %v325 = vpop.permute.xlu0 %324
        %326 = vrot.lane.b32.xlu0 %v308, 126
        %v327 = vpop.permute.xlu0 %326
        %328 = vrot.lane.b32.xlu0 %v309, 126
        %v329 = vpop.permute.xlu0 %328
        %330 = vrot.lane.b32.xlu0 %v311, 126
        %v331 = vpop.permute.xlu0 %330
        %vm332 = vcmask 1031168
        %v333 = vsel %vm332, %v325, %v327
        %v334 = vsel %vm332, %v327, %v329
        %v335 = vsel %vm332, %v329, %v331
        %336 = vrot.lane.b32.xlu0 %v307, 110
        %v337 = vpop.permute.xlu0 %336
        %338 = vrot.lane.b32.xlu0 %v308, 110
        %v339 = vpop.permute.xlu0 %338
        %340 = vrot.lane.b32.xlu0 %v309, 110
        %v341 = vpop.permute.xlu0 %340
        %342 = vrot.lane.b32.xlu0 %v311, 110
        %v343 = vpop.permute.xlu0 %342
        %vm344 = vcmask 900096
        %v345 = vsel %vm344, %v337, %v339
        %v346 = vsel %vm344, %v339, %v341
        %v347 = vsel %vm344, %v341, %v343
        %348 = vrot.lane.b32.xlu0 %v307, 109
        %v349 = vpop.permute.xlu0 %348
        %350 = vrot.lane.b32.xlu0 %v308, 109
        %v351 = vpop.permute.xlu0 %350
        %352 = vrot.lane.b32.xlu0 %v309, 109
        %v353 = vpop.permute.xlu0 %352
        %354 = vrot.lane.b32.xlu0 %v311, 109
        %v355 = vpop.permute.xlu0 %354
        %vm356 = vcmask 891904
        %v357 = vsel %vm356, %v349, %v351
        %v358 = vsel %vm356, %v351, %v353
        %v359 = vsel %vm356, %v353, %v355
        %360 = vrot.lane.b32.xlu0 %v307, 108
        %v361 = vpop.permute.xlu0 %360
        %362 = vrot.lane.b32.xlu0 %v308, 108
        %v363 = vpop.permute.xlu0 %362
        %364 = vrot.lane.b32.xlu0 %v309, 108
        %v365 = vpop.permute.xlu0 %364
        %366 = vrot.lane.b32.xlu0 %v311, 108
        %v367 = vpop.permute.xlu0 %366
        %vm368 = vcmask 883712
        %v369 = vsel %vm368, %v361, %v363
        %v370 = vsel %vm368, %v363, %v365
        %v371 = vsel %vm368, %v365, %v367
        %372 = vrot.lane.b32.xlu0 %v307, 92
        %v373 = vpop.permute.xlu0 %372
        %374 = vrot.lane.b32.xlu0 %v308, 92
        %v375 = vpop.permute.xlu0 %374
        %376 = vrot.lane.b32.xlu0 %v309, 92
        %v377 = vpop.permute.xlu0 %376
        %378 = vrot.lane.b32.xlu0 %v311, 92
        %v379 = vpop.permute.xlu0 %378
        %vm380 = vcmask 752640
        %v381 = vsel %vm380, %v373, %v375
        %v382 = vsel %vm380, %v375, %v377
        %v383 = vsel %vm380, %v377, %v379
        %384 = vrot.lane.b32.xlu0 %v307, 91
        %v385 = vpop.permute.xlu0 %384
        %386 = vrot.lane.b32.xlu0 %v308, 91
        %v387 = vpop.permute.xlu0 %386
        %388 = vrot.lane.b32.xlu0 %v309, 91
        %v389 = vpop.permute.xlu0 %388
        %390 = vrot.lane.b32.xlu0 %v311, 91
        %v391 = vpop.permute.xlu0 %390
        %vm392 = vcmask 744448
        %v393 = vsel %vm392, %v385, %v387
        %v394 = vsel %vm392, %v387, %v389
        %v395 = vsel %vm392, %v389, %v391
        %396 = vrot.lane.b32.xlu0 %v307, 90
        %v397 = vpop.permute.xlu0 %396
        %398 = vrot.lane.b32.xlu0 %v308, 90
        %v399 = vpop.permute.xlu0 %398
        %400 = vrot.lane.b32.xlu0 %v309, 90
        %v401 = vpop.permute.xlu0 %400
        %402 = vrot.lane.b32.xlu0 %v311, 90
        %v403 = vpop.permute.xlu0 %402
        %vm404 = vcmask 736256
        %v405 = vsel %vm404, %v397, %v399
        %v406 = vsel %vm404, %v399, %v401
        %v407 = vsel %vm404, %v401, %v403
        %vm408 = vcmask 1043456
        %v411 = vsel %vm408, %v307, %v321
        %v415 = vsel %vm408, %v308, %v322
        %v419 = vsel %vm408, %v309, %v323
        %v423 = vsel %vm408, %v333, %v345
        %v427 = vsel %vm408, %v334, %v346
        %v431 = vsel %vm408, %v335, %v347
        %v435 = vsel %vm408, %v357, %v369
        %v439 = vsel %vm408, %v358, %v370
        %v443 = vsel %vm408, %v359, %v371
        %v447 = vsel %vm408, %v381, %v393
        %v451 = vsel %vm408, %v382, %v394
        %v455 = vsel %vm408, %v383, %v395
        %v457 = vld [vmem:[%s1] sm:$0xf]
        %v458 = vld [vmem:[%s2] sm:$0xff]
        %460 = vset.pattern.permute.xlu0 0
        %461 = vperm.xlu0 %460, %v458
        %v462 = vpop.permute.xlu0 %461
        %vm464 = vcmask 588800
        %v466 = vsel %vm464, %v457, 0
        %v469 = vsel %vm408, %v405, 0
        %v472 = vsel %vm408, %v406, 0
        %v475 = vsel %vm408, %v407, 0
        %477 = vmatprep.subr.bf16.mxu0 %v415
        %478 = vmatpush1.bf16.msra.mxu0 %v411
        %479 = vmatprep.subr.bf16.mxu0 %v427
        %480 = vmatpush1.bf16.msra.mxu0 %v423
        %481 = vmatprep.subr.bf16.mxu0 %v439
        %482 = vmatpush1.bf16.msra.mxu0 %v435
        %483 = vmatprep.subr.bf16.mxu0 %v451
        %484 = vmatpush1.bf16.msra.mxu0 %v447
        %485 = vmatprep.subr.bf16.mxu0 %v472
        %486 = vmatpush1.bf16.msra.mxu0 %v469
        %487 = vmatprep.subr.bf16.mxu0 0
        %488 = vmatpush1.bf16.msra.mxu0 0
        %489 = vmatprep.subr.bf16.mxu0 0
        %490 = vmatpush1.bf16.msra.mxu0 0
        %491 = vmatprep.subr.bf16.mxu0 0
        %492 = vmatpush1.bf16.msra.mxu0 0
        %493 = vmatprep.subr.bf16.mxu0 0
        %494 = vmatpush1.bf16.msra.mxu0 0
        %495 = vmatprep.subr.bf16.mxu0 0
        %496 = vmatpush1.bf16.msra.mxu0 0
        %497 = vmatprep.subr.bf16.mxu0 0
        %498 = vmatpush1.bf16.msra.mxu0 0
        %499 = vmatprep.subr.bf16.mxu0 0
        %500 = vmatpush1.bf16.msra.mxu0 0
        %501 = vmatprep.subr.bf16.mxu0 0
        %502 = vmatpush1.bf16.msra.mxu0 0
        %503 = vmatprep.subr.bf16.mxu0 0
        %504 = vmatpush1.bf16.msra.mxu0 0
        %505 = vmatprep.subr.bf16.mxu0 0
        %506 = vmatpush1.bf16.msra.mxu0 0
        %507 = vmatprep.subr.bf16.mxu0 0
        %508 = vmatpush1.bf16.msra.mxu0 0
        %509 = vmatprep.mubr.bf16.mxu0 0
        %510 = vmatmul.mubr.bf16.gmra.mrb[0].mxu0 %v466
        %v511 = vpop.f32.mrb[0].mxu0
        %v512 = vadd.f32 %v462, %v511
        %v513 = vpop.f32.mrb[0].mxu0
        %v514 = vadd.f32 %v462, %v513
        %v515 = vpop.f32.mrb[0].mxu0
        %v516 = vpop.f32.mrb[0].mxu0
        %517 = vdwg.mxu0
        %518 = vmatprep.subr.bf16.mxu0 0
        %519 = vmatpush1.bf16.msra.mxu0 %v419
        %520 = vmatprep.subr.bf16.mxu0 0
        %521 = vmatpush1.bf16.msra.mxu0 %v431
        %522 = vmatprep.subr.bf16.mxu0 0
        %523 = vmatpush1.bf16.msra.mxu0 %v443
        %524 = vmatprep.subr.bf16.mxu0 0
        %525 = vmatpush1.bf16.msra.mxu0 %v455
        %526 = vmatprep.subr.bf16.mxu0 0
        %527 = vmatpush1.bf16.msra.mxu0 %v475
        %528 = vmatprep.subr.bf16.mxu0 0
        %529 = vmatpush1.bf16.msra.mxu0 0
        %530 = vmatprep.subr.bf16.mxu0 0
        %531 = vmatpush1.bf16.msra.mxu0 0
        %532 = vmatprep.subr.bf16.mxu0 0
        %533 = vmatpush1.bf16.msra.mxu0 0
        %534 = vmatprep.subr.bf16.mxu0 0
        %535 = vmatpush1.bf16.msra.mxu0 0
        %536 = vmatprep.subr.bf16.mxu0 0
        %537 = vmatpush1.bf16.msra.mxu0 0
        %538 = vmatprep.subr.bf16.mxu0 0
        %539 = vmatpush1.bf16.msra.mxu0 0
        %540 = vmatprep.subr.bf16.mxu0 0
        %541 = vmatpush1.bf16.msra.mxu0 0
        %542 = vmatprep.subr.bf16.mxu0 0
        %543 = vmatpush1.bf16.msra.mxu0 0
        %544 = vmatprep.subr.bf16.mxu0 0
        %545 = vmatpush1.bf16.msra.mxu0 0
        %546 = vmatprep.subr.bf16.mxu0 0
        %547 = vmatpush1.bf16.msra.mxu0 0
        %548 = vmatprep.subr.bf16.mxu0 0
        %549 = vmatpush1.bf16.msra.mxu0 0
        %550 = vmatprep.mubr.bf16.mxu0 0
        %551 = vmatmul.mubr.bf16.gmra.mrb[0].mxu0 %v466
        %v552 = vpop.f32.mrb[0].mxu0
        %v553 = vadd.f32 %v462, %v552
        %v554 = vpop.f32.mrb[0].mxu0
        %v555 = vpop.f32.mrb[0].mxu0
        %v556 = vpop.f32.mrb[0].mxu0
        %557 = vdwg.mxu0
        %558 = vst [vmem:[%s271] sm:$0xff] %v512
        %559 = vst [vmem:[%s271 + $0x8] sm:$0xff] %v514
        %560 = vst [vmem:[%s271 + $0x10] sm:$0xff] %v553
        %v561 = vld [vmem:[%s284] sm:$0x7]
        %v563 = vlaneseq
        %v564 = vshrl.u32 %v563, 7
        %v565 = vsub.s32 0, %v564
        %v566 = vrot.slane %v561, %v565
        %v567 = vlaneseq
        %v568 = vshrl.u32 %v567, 7
        %v569 = vsub.s32 1, %v568
        %v570 = vrot.slane %v561, %v569
        %v571 = vlaneseq
        %v572 = vshrl.u32 %v571, 7
        %v573 = vsub.s32 2, %v572
        %v574 = vrot.slane %v561, %v573
        %v578 = vmul.f32 %v512, %v566
        %v579 = vmul.f32 %v514, %v570
        %v580 = vmul.f32 %v553, %v574
        %v581 = vadd.f32 %v578, %v579
        %v582 = vadd.f32 %v581, %v580
        %583 = vadd.xlane.f32.xlu0 %v582
        %v584 = vpop.xlane.xlu0 %583
        %v585 = vmul.f32 %v578, %v512
        %v586 = vmul.f32 %v579, %v514
        %v587 = vmul.f32 %v580, %v553
        %v588 = vadd.f32 %v585, %v586
        %v589 = vadd.f32 %v588, %v587
        %590 = vadd.xlane.f32.xlu0 %v589
        %v591 = vpop.xlane.xlu0 %590
        %vm592 = vcmask 7168
        %v593 = vsel %vm592, %v584, %v591
        %vm594 = vcmask 15360
        %595 = vst.msk [vmem:[%s293] sm:$0xff] %vm594, %v593
        %s596 = sand.u32 %s139, 1
        %s597 = scalar_lea.sflag [#allocation4], %s596
        %s598 = sand.u32 %s139, 1
        %s599 = smul.addr %s598, 24
        %s600 = scalar_lea.vmem [#allocation5], %s599
        %p601 = scmp.lt.s32.totalorder %s27, 1
        %s602 = scalar_select %p601, %s27, 1
        %p603 = scmp.lt.s32.totalorder %s28, 0
        %s604 = scalar_select %p603, %s28, 0
        %s605 = sadd.s32 %s604, %s602
        %s606 = smul.addr %s605, 8
        %s607 = scalar_lea.vmem %s5, %s606
        // Predicated region
        $region41: #{tpu_custom_call.1} parent=35 // pred_check
          %p608 = pneg %p149
        $region42: #{tpu_custom_call.1} parent=35 // pred_check_branch
          %610 = sbr.rel (%p608) target = $region44
        $region43: #{tpu_custom_call.1} parent=35 // pred_region
          %s611 = smul.u32 3, %s28
          %s613 = ssub.s32 384, 384
          %614 = vsyncadd %s597, %s613
          %s615 = smul.addr %s27, 3
          %s616 = sadd.s32 %s611, %s615
          %s617 = smul.addr %s616, 128
          %s618 = scalar_lea.hbm %s4, %s617
          %s620 = sshll.u32 %s600, 4
          %s621 = int_to_ptr.vmem [resolvable:$true] %s620
          %623 = dma.vmem_to_hbm [thread:$0]  %s621, 384, %s618, %s597
        $region44: #{tpu_custom_call.1} parent=35 // pred_fallthru
          _
        // Predicated region
        $region45: #{tpu_custom_call.1} parent=35 // pred_check
          %p624 = pneg %p177
        $region46: #{tpu_custom_call.1} parent=35 // pred_check_branch
          %626 = sbr.rel (%p624) target = $region48
        $region47: #{tpu_custom_call.1} parent=35 // pred_region
          _
        $region48: #{tpu_custom_call.1} parent=35 // pred_fallthru
          _
      $region36: #{tpu_custom_call.1} parent=5 // pred_fallthru
        _
      %p627 = scmp.le.s32.totalorder 2, %s18
      // Predicated region
      $region49: #{tpu_custom_call.1} parent=5 // pred_check
        %p628 = pneg %p627
      $region50: #{tpu_custom_call.1} parent=5 // pred_check_branch
        %630 = sbr.rel (%p628) target = $region52
      $region51: #{tpu_custom_call.1} parent=5 // pred_region
        %s631 = ssub.s32 %s18, 2
        // Predicated region
        $region53: #{tpu_custom_call.1} parent=51 // pred_check
          %p632 = pneg %p155
        $region54: #{tpu_custom_call.1} parent=51 // pred_check_branch
          %634 = sbr.rel (%p632) target = $region56
        $region55: #{tpu_custom_call.1} parent=51 // pred_region
          %s635 = sand.u32 %s140, 1
          %s636 = scalar_lea.sflag [#allocation4], %s635
          %s637 = sand.u32 %s140, 1
          %s638 = smul.addr %s637, 24
          %s639 = scalar_lea.vmem [#allocation5], %s638
          %640 = dma.done %s636, 384
        $region56: #{tpu_custom_call.1} parent=51 // pred_fallthru
          _
        // Predicated region
        $region57: #{tpu_custom_call.1} parent=51 // pred_check
          %p641 = pneg %p183
        $region58: #{tpu_custom_call.1} parent=51 // pred_check_branch
          %643 = sbr.rel (%p641) target = $region60
        $region59: #{tpu_custom_call.1} parent=51 // pred_region
          %p644 = scmp.lt.s32.totalorder %s29, 1
          %s645 = scalar_select %p644, %s29, 1
          %p646 = scmp.lt.s32.totalorder %s30, 0
          %s647 = scalar_select %p646, %s30, 0
          %s648 = sadd.s32 %s647, %s645
          %s649 = smul.addr %s648, 8
          %s650 = scalar_lea.vmem %s5, %s649
        $region60: #{tpu_custom_call.1} parent=51 // pred_fallthru
          _
      $region52: #{tpu_custom_call.1} parent=5 // pred_fallthru
        _
    $region6: #{tpu_custom_call.1} parent=1 // loop_footer
      %s22 = sadd.s32 1, %s18
    $region7: #{tpu_custom_call.1} parent=1 // loop_footer_branch
      %17 = sbr.rel target = $region3
    $region8: #{tpu_custom_call.1} parent=1 // loop_exit
      _
    %651 = vsyncpa [#allocation3], 1
    %s652 = scalar_lea.sflag [#allocation3], 1
    %653 = vsyncpa %s652, 1
    %654 = vsyncpa [#allocation4], 1
    %s655 = scalar_lea.sflag [#allocation4], 1
    %656 = vsyncpa %s655, 1

</llo_original>
